<compile_context>
chip_gen: v5e
topology: v5e:2x2
jax: 0.10.0
libtpu: 0.0.40
codegen_flags: <defaults>
</compile_context>

<pallas_src>
import functools

import numpy as np
import jax
import jax.numpy as jnp
from jax.scipy.special import erf as jsp_erf
from jax.experimental import pallas as pl
from jax.experimental.pallas import tpu as pltpu


# ----------------------------------------------------------------------------
# small helpers
# ----------------------------------------------------------------------------
def _round_up(x, m):
    return ((x + m - 1) // m) * m


def _pick_batch_block(b):
    # Amortize the ~0.35us per-grid-step overhead by processing several batch rows per
    # step, but keep >= 2 grid steps when possible so both v7x TensorCores get work.
    # TODO(synk): on single-TC chips (v5e/v6e) the ">= 2 steps" constraint is not
    # needed and batch_block = b is strictly better for small batches.
    for cand in (8, 4, 2):
        if b % cand == 0 and b // cand >= 2:
            return cand
    return 1


def _gelu_tanh(x):
    # tanh-form GELU: one EUP tanh + a few VALU ops instead of the ~10-op erf
    # polynomial + exp. Deviation from exact-erf GELU is <~1e-3 (far less at the
    # small activation magnitudes here), within the verification tolerance.
    c = 0.7978845608028654  # sqrt(2/pi)
    return 0.5 * x * (1.0 + jnp.tanh(c * (x + 0.044715 * x * x * x)))


def _layernorm(x, g, b, eps=1e-5):
    mu = jnp.mean(x, axis=-1, keepdims=True)
    var = jnp.mean((x - mu) ** 2, axis=-1, keepdims=True)
    return (x - mu) * jax.lax.rsqrt(var + eps) * g + b


# ----------------------------------------------------------------------------
# Pallas kernels
# ----------------------------------------------------------------------------
def _proj_kernel(x_ref, w_ref, b_ref, o_ref):
    # one (rows, Din) @ (Din, E) tile + bias
    o_ref[0] = (jnp.dot(x_ref[0], w_ref[0], preferred_element_type=jnp.float32)
                + b_ref[0]).astype(o_ref.dtype)


def projection_pair(x2, w2, b2, *, row_block=512):
    """Both patch projections fused in one row-tiled pallas_call.

    x2: (2, N, Din) stacked [img_patches, tri_patches]; w2: (2, Din, E); b2: (2, 1, E)
    Returns (2, N, E). Row tiling keeps VMEM use bounded / DMA pipelined at scale.
    TODO(synk): at production sizes cast the matmul operands to bf16 (keep f32 accum).
    """
    two, n, din = x2.shape
    dout = w2.shape[-1]
    bn = row_block if n >= row_block else _round_up(n, 8)
    n_pad = _round_up(n, bn)
    if n_pad != n:
        x2 = jnp.pad(x2, ((0, 0), (0, n_pad - n), (0, 0)))
    out = pl.pallas_call(
        _proj_kernel,
        out_shape=jax.ShapeDtypeStruct((two, n_pad, dout), jnp.float32),
        grid=(two, n_pad // bn),
        in_specs=[
            pl.BlockSpec((1, bn, din), lambda s, r: (s, r, 0)),
            pl.BlockSpec((1, din, dout), lambda s, r: (s, 0, 0)),
            pl.BlockSpec((1, 1, dout), lambda s, r: (s, 0, 0)),
        ],
        out_specs=pl.BlockSpec((1, bn, dout), lambda s, r: (s, r, 0)),
        compiler_params=pltpu.CompilerParams(
            dimension_semantics=("parallel", "parallel")),
    )(x2, w2, b2)
    return out[:, :n, :]


def _block_kernel(x_ref, tx_ref, wk_ref, wv_ref, wtq_ref, wo_ref,
                  ln1g_ref, ln1b_ref, w1_ref, b1_ref, w2_ref, b2_ref,
                  ln2g_ref, ln2b_ref, o_ref,
                  *, head_num, dk_scale, t_real):
    bb, tp, e = x_ref.shape
    dh = e // head_num
    m = bb * tp

    # Fold the batch rows of this grid step into the matmul M dimension: every
    # E-wide GEMM below runs at M = bb*Tp with lane-dense outputs.
    x2d = x_ref[...].reshape(m, e)
    tx2d = tx_ref[...].reshape(m, e)

    # Lane-dense full-width projections (weights pre-laid-out so the output lane
    # index is h*dh + d). Only the pieces the module actually uses are computed:
    # K, V from the image branch, Q from the trimap branch.
    k_full = jnp.dot(x2d, wk_ref[...], preferred_element_type=jnp.float32)
    v_full = jnp.dot(x2d, wv_ref[...], preferred_element_type=jnp.float32)
    q_full = jnp.dot(tx2d, wtq_ref[...], preferred_element_type=jnp.float32)

    def split_heads(z2d):
        # (m, E) with lanes ordered (h, d) -> (H*bb, Tp, dh) batched operand in
        # (head, batch-row)-major order. Lane slices of values + one major-axis
        # concatenate: no masked ref stores, no 4D transposes.
        parts = [z2d[:, h * dh:(h + 1) * dh].reshape(bb, tp, dh)
                 for h in range(head_num)]
        return jnp.concatenate(parts, axis=0)

    q3 = split_heads(q_full)
    k3 = split_heads(k_full)
    v3 = split_heads(v_full)

    # Attention batched over (head, batch-row): one MXU op per stage.
    # NOTE: the original module MULTIPLIES logits by sqrt(d_head) (quirk preserved).
    energy = jax.lax.dot_general(
        q3, k3, (((2,), (2,)), ((0,), (0,))),
        preferred_element_type=jnp.float32) * dk_scale              # (H*bb, Tp, Tp)

    # Key-side mask for the padded token rows: a single broadcast (1, 1, Tp) row.
    key_idx = jax.lax.broadcasted_iota(jnp.int32, (1, 1, tp), 2)
    energy = jnp.where(key_idx < t_real, energy, -1e30)
    energy = energy - jnp.max(energy, axis=-1, keepdims=True)
    p = jnp.exp(energy)
    attn = p * pl.reciprocal(jnp.sum(p, axis=-1, keepdims=True), approx=True)
    ctx = jax.lax.dot_general(
        attn, v3, (((2,), (1,)), ((0,), (0,))),
        preferred_element_type=jnp.float32)                         # (H*bb, Tp, dh)

    # Out-projection without the head concat: contract (head, dh) against the
    # (H, dh, E) weight as H lane-dense (m, dh)@(dh, E) dots accumulated in vregs
    # (mathematically the dot_general contracting ((head, dh)), but lowering-safe;
    # no cat scratch, no VMEM round-trip, no masked narrow stores).
    attn_out = jnp.dot(ctx[0:bb].reshape(m, dh), wo_ref[0],
                       preferred_element_type=jnp.float32)
    for h in range(1, head_num):
        attn_out = attn_out + jnp.dot(
            ctx[h * bb:(h + 1) * bb].reshape(m, dh), wo_ref[h],
            preferred_element_type=jnp.float32)

    # residual + LayerNorm1
    x1 = _layernorm(x2d + attn_out, ln1g_ref[...], ln1b_ref[...])

    # MLP (Linear -> GELU -> Linear); dropouts are identity (inference)
    hid = jnp.dot(x1, w1_ref[...], preferred_element_type=jnp.float32) + b1_ref[...]
    hid = _gelu_tanh(hid)
    mlp = jnp.dot(hid, w2_ref[...], preferred_element_type=jnp.float32) + b2_ref[...]

    # residual + LayerNorm2
    out2d = _layernorm(x1 + mlp, ln2g_ref[...], ln2b_ref[...])
    o_ref[...] = out2d.reshape(bb, tp, e).astype(o_ref.dtype)


def transformer_block(x, tx, p, *, head_num, t_real, batch_block):
    b, tp, e = x.shape
    dh = e // head_num
    md = p['w1'].shape[1]
    dk_scale = float(dh ** 0.5)   # module multiplies logits by sqrt(d_head)
    kernel = functools.partial(_block_kernel, head_num=head_num, dk_scale=dk_scale,
                               t_real=t_real)

    def full(shape):
        return pl.BlockSpec(shape, lambda i, _shape=shape: (0,) * len(_shape))

    seq_spec = pl.BlockSpec((batch_block, tp, e), lambda i: (i, 0, 0))

    # TODO(synk): at production sizes (E=768, mlp=3072) single-buffer the constant-
    # index weight specs (pipeline_mode=pl.Buffered(1)) or tile w1/w2 over a
    # K-reduction grid axis, raise vmem_limit_bytes with headroom (v7x: 64 MiB VMEM,
    # v5e scoped default: 16 MiB), and cast matmul operands to bf16 (keep LN/softmax/
    # GELU math in f32). Unnecessary at these toy shapes.
    return pl.pallas_call(
        kernel,
        out_shape=jax.ShapeDtypeStruct((b, tp, e), jnp.float32),
        grid=(b // batch_block,),
        in_specs=[
            seq_spec, seq_spec,
            full((e, e)), full((e, e)), full((e, e)),
            full((head_num, dh, e)),
            full((1, e)), full((1, e)),
            full((e, md)), full((1, md)), full((md, e)), full((1, e)),
            full((1, e)), full((1, e)),
        ],
        out_specs=seq_spec,
        compiler_params=pltpu.CompilerParams(dimension_semantics=("parallel",)),
    )(x, tx, p['wk'], p['wv'], p['wtq'], p['wo'],
      p['ln1g'], p['ln1b'], p['w1'], p['b1'], p['w2'], p['b2'],
      p['ln2g'], p['ln2b'])


# ----------------------------------------------------------------------------
# JAX glue (patchify, parameter setup, full forward)
# ----------------------------------------------------------------------------
def patchify(x, patch_dim):
    # einops: 'b c (patch_x x) (patch_y y) -> b (x y) (patch_x patch_y c)'
    bsz, c, hgt, wid = x.shape
    px = patch_dim
    nx, ny = hgt // px, wid // px
    x = x.reshape(bsz, c, px, nx, px, ny)        # b c px x py y
    x = x.transpose(0, 3, 5, 2, 4, 1)            # b x y px py c
    return x.reshape(bsz, nx * ny, px * px * c)


def init_torch_params(key, *, in_channels, img_dim, patch_dim, emb, mlp_dim,
                      block_num, num_classes):
    token_dim = in_channels * patch_dim ** 2
    num_tokens = (img_dim // patch_dim) ** 2
    ks = iter(jax.random.split(key, 16 + 12 * block_num))

    def n(shape, s=0.02):
        return (s * jax.random.normal(next(ks), shape)).astype(jnp.float32)

    def u(shape):
        return jax.random.uniform(next(ks), shape, dtype=jnp.float32)

    tp = {
        'proj_w': n((emb, token_dim)), 'proj_b': n((emb,)),
        'tproj_w': n((emb, token_dim)), 'tproj_b': n((emb,)),
        'embedding': u((num_tokens + 1, emb)),      # torch.rand
        'cls_token': n((1, 1, emb)),                # torch.randn (scaled for stability)
        'head_w': n((num_classes, emb)), 'head_b': n((num_classes,)),
        'blocks': [],
    }
    for _ in range(block_num):
        tp['blocks'].append({
            'wq': n((3 * emb, emb)), 'wtq': n((3 * emb, emb)), 'wo': n((emb, emb)),
            'ln1g': 1.0 + n((emb,)), 'ln1b': n((emb,)),
            'w1': n((mlp_dim, emb)), 'b1': n((mlp_dim,)),
            'w2': n((emb, mlp_dim)), 'b2': n((emb,)),
            'ln2g': 1.0 + n((emb,)), 'ln2b': n((emb,)),
        })
    return tp


def to_kernel_params(tp_, head_num):
    emb = tp_['embedding'].shape[-1]
    dh = emb // head_num

    def qkv_dense(w_torch, which):
        # torch Linear weight (3E, E); einops 'b t (d k h) -> k b h t d' factors the
        # output index as o = d*(3*H) + k*H + h. Keep only the piece actually used
        # and lay it out as a dense (E_in, E_out) matrix whose output columns are
        # ordered h*dh + d (heads contiguous along lanes) -> one lane-dense matmul.
        w = w_torch.reshape(dh, 3, head_num, emb)        # (d, k, h, e_in)
        w = jnp.transpose(w[:, which], (2, 1, 0))        # (e_in, h, d)
        return w.reshape(emb, emb)

    kp = {
        'proj_w': tp_['proj_w'].T, 'proj_b': tp_['proj_b'][None, :],
        'tproj_w': tp_['tproj_w'].T, 'tproj_b': tp_['tproj_b'][None, :],
        'embedding': tp_['embedding'], 'cls_token': tp_['cls_token'],
        'head_w': tp_['head_w'].T, 'head_b': tp_['head_b'],
        'blocks': [],
    }
    for blk in tp_['blocks']:
        kp['blocks'].append({
            'wk': qkv_dense(blk['wq'], 1),       # keys    <- image branch
            'wv': qkv_dense(blk['wq'], 2),       # values  <- image branch
            'wtq': qkv_dense(blk['wtq'], 0),     # queries <- trimap branch
            # out-projection: input index j = h*dh + d -> (H, dh, E_out)
            'wo': blk['wo'].T.reshape(head_num, dh, emb),
            'ln1g': blk['ln1g'][None, :], 'ln1b': blk['ln1b'][None, :],
            'w1': blk['w1'].T, 'b1': blk['b1'][None, :],
            'w2': blk['w2'].T, 'b2': blk['b2'][None, :],
            'ln2g': blk['ln2g'][None, :], 'ln2b': blk['ln2b'][None, :],
        })
    return kp


def vit_tx_forward(x_img, trimap, kp, *, patch_dim, head_num):
    emb = kp['embedding'].shape[-1]
    img_p = patchify(x_img, patch_dim)                     # (B, T0, token_dim)
    tri_p = patchify(trimap, patch_dim)
    bsz, t0, dtok = img_p.shape

    # both patch projections fused in one row-tiled pallas_call
    stacked_x = jnp.stack([img_p.reshape(bsz * t0, dtok),
                           tri_p.reshape(bsz * t0, dtok)])
    stacked_w = jnp.stack([kp['proj_w'], kp['tproj_w']])
    stacked_b = jnp.stack([kp['proj_b'], kp['tproj_b']])
    projected = projection_pair(stacked_x, stacked_w, stacked_b)   # (2, B*T0, E)
    proj = projected[0].reshape(bsz, t0, emb)
    tproj = projected[1].reshape(bsz, t0, emb)

    cls = jnp.broadcast_to(kp['cls_token'], (bsz, 1, emb))
    pos = kp['embedding'][:t0 + 1]
    xs = jnp.concatenate([cls, proj], axis=1) + pos
    txs = jnp.concatenate([cls, tproj], axis=1) + pos
    # TODO(synk): nn.Dropout layers are identity here (inference mode, no RNG state).

    # Pad the token axis to a sublane multiple once here; padded key rows are masked
    # inside the attention kernel and padded query rows are discarded below.
    t_real = t0 + 1
    t_pad = _round_up(t_real, 8)
    if t_pad != t_real:
        xs = jnp.pad(xs, ((0, 0), (0, t_pad - t_real), (0, 0)))
        txs = jnp.pad(txs, ((0, 0), (0, t_pad - t_real), (0, 0)))

    bb = _pick_batch_block(bsz)
    for blk in kp['blocks']:
        xs = transformer_block(xs, txs, blk, head_num=head_num,
                               t_real=t_real, batch_block=bb)

    # Classification head in plain XLA: at (B, E) a standalone pallas_call is pure
    # launch overhead.
    cls_out = xs[:, 0, :]
    return cls_out @ kp['head_w'] + kp['head_b']


# ----------------------------------------------------------------------------
# pure-JAX reference (original torch-layout weights, exact erf GELU) for verification
# ----------------------------------------------------------------------------
def _ref_ln(x, g, b, eps=1e-5):
    mu = jnp.mean(x, axis=-1, keepdims=True)
    var = jnp.mean((x - mu) ** 2, axis=-1, keepdims=True)
    return (x - mu) / jnp.sqrt(var + eps) * g + b


def _ref_attention(x, tx, wq, wtq, wo, head_num):
    bsz, t, emb = x.shape
    dh = emb // head_num

    def split(z):
        z = z.reshape(bsz, t, dh, 3, head_num).transpose(3, 0, 4, 1, 2)  # k b h t d
        return z[0], z[1], z[2]

    q, k, v = split(x @ wq.T)
    tq, _, _ = split(tx @ wtq.T)
    dk = (emb // head_num) ** 0.5
    energy = jnp.einsum('bhid,bhjd->bhij', tq, k) * dk
    attn = jax.nn.softmax(energy, axis=-1)
    o = jnp.einsum('bhij,bhjd->bhid', attn, v)
    o = o.transpose(0, 2, 1, 3).reshape(bsz, t, emb)
    return o @ wo.T


def _ref_block(x, tx, blk, head_num):
    a = _ref_attention(x, tx, blk['wq'], blk['wtq'], blk['wo'], head_num)
    x = _ref_ln(x + a, blk['ln1g'], blk['ln1b'])
    h = x @ blk['w1'].T + blk['b1']
    h = 0.5 * h * (1.0 + jsp_erf(h / jnp.sqrt(2.0)))
    m = h @ blk['w2'].T + blk['b2']
    return _ref_ln(x + m, blk['ln2g'], blk['ln2b'])


def ref_forward(x_img, trimap, tp, *, patch_dim, head_num):
    emb = tp['embedding'].shape[-1]
    img_p = patchify(x_img, patch_dim)
    tri_p = patchify(trimap, patch_dim)
    bsz, t0, _ = img_p.shape
    proj = img_p @ tp['proj_w'].T + tp['proj_b']
    tproj = tri_p @ tp['tproj_w'].T + tp['tproj_b']
    cls = jnp.broadcast_to(tp['cls_token'], (bsz, 1, emb))
    xs = jnp.concatenate([cls, proj], axis=1) + tp['embedding'][:t0 + 1]
    txs = jnp.concatenate([cls, tproj], axis=1) + tp['embedding'][:t0 + 1]
    for blk in tp['blocks']:
        xs = _ref_block(xs, txs, blk, head_num)
    return xs[:, 0, :] @ tp['head_w'].T + tp['head_b']


# ----------------------------------------------------------------------------
if __name__ == "__main__":
    B, C, IMG, PATCH = 4, 4, 16, 4              # -> num_tokens=16, token_dim=64, T=17
    EMB, HEADS, MLP_DIM, BLOCKS, NUM_CLASSES = 32, 4, 64, 2, 1

    key = jax.random.PRNGKey(0)
    kx, kt, kparam = jax.random.split(key, 3)
    x_img = jax.random.normal(kx, (B, C, IMG, IMG), dtype=jnp.float32)
    trimap = jax.random.normal(kt, (B, C, IMG, IMG), dtype=jnp.float32)

    torch_params = init_torch_params(
        kparam, in_channels=C, img_dim=IMG, patch_dim=PATCH, emb=EMB,
        mlp_dim=MLP_DIM, block_num=BLOCKS, num_classes=NUM_CLASSES)
    kernel_params = to_kernel_params(torch_params, HEADS)

    out = vit_tx_forward(x_img, trimap, kernel_params, patch_dim=PATCH, head_num=HEADS)
    out = jax.block_until_ready(out)

    ref = ref_forward(x_img, trimap, torch_params, patch_dim=PATCH, head_num=HEADS)
    assert out.shape == (B, NUM_CLASSES), out.shape
    max_err = float(np.max(np.abs(np.asarray(out) - np.asarray(ref))))
    assert np.allclose(np.asarray(out), np.asarray(ref), atol=2e-3, rtol=2e-3), max_err

    print("KERNEL_OK")
</pallas_src>

<mosaic_0001>
module attributes {stable_mosaic.version = 11 : i64} {
  func.func @_proj_kernel(%arg0: i32, %arg1: i32, %arg2: memref<1x64x64xf32, #tpu.memory_space<vmem>>, %arg3: memref<1x64x32xf32, #tpu.memory_space<vmem>>, %arg4: memref<1x1x32xf32, #tpu.memory_space<vmem>>, %arg5: memref<1x64x32xf32, #tpu.memory_space<vmem>>) attributes {dimension_semantics = [#tpu.dimension_semantics<parallel>, #tpu.dimension_semantics<parallel>], iteration_bounds = array<i64: 2, 1>, scalar_prefetch = 0 : i64, scratch_operands = 0 : i64, tpu.core_type = #tpu.core_type<tc>, window_params = [{transform_indices = @transform_0, window_bounds = array<i64: 1, 64, 64>}, {transform_indices = @transform_1, window_bounds = array<i64: 1, 64, 32>}, {transform_indices = @transform_2, window_bounds = array<i64: 1, 1, 32>}, {transform_indices = @transform_3, window_bounds = array<i64: 1, 64, 32>}]} {
    %c0 = arith.constant 0 : index
    %c0_0 = arith.constant 0 : index
    %c0_1 = arith.constant 0 : index
    %0 = vector.load %arg2[%c0, %c0_0, %c0_1] : memref<1x64x64xf32, #tpu.memory_space<vmem>>, vector<1x64x64xf32>
    %1 = vector.shape_cast %0 : vector<1x64x64xf32> to vector<64x64xf32>
    %c0_2 = arith.constant 0 : index
    %c0_3 = arith.constant 0 : index
    %c0_4 = arith.constant 0 : index
    %2 = vector.load %arg3[%c0_2, %c0_3, %c0_4] : memref<1x64x32xf32, #tpu.memory_space<vmem>>, vector<1x64x32xf32>
    %3 = vector.shape_cast %2 : vector<1x64x32xf32> to vector<64x32xf32>
    %cst = arith.constant dense<0.000000e+00> : vector<64x32xf32>
    %4 = tpu.matmul %1, %3, %cst {dimension_numbers = #tpu.dot_dimension_numbers<[1], [0], [0], [1], [0, 0, 1, 1], [], []>} : vector<64x64xf32>, vector<64x32xf32>, vector<64x32xf32> -> vector<64x32xf32>
    %c0_5 = arith.constant 0 : index
    %c0_6 = arith.constant 0 : index
    %c0_7 = arith.constant 0 : index
    %5 = vector.load %arg4[%c0_5, %c0_6, %c0_7] : memref<1x1x32xf32, #tpu.memory_space<vmem>>, vector<1x1x32xf32>
    %6 = vector.shape_cast %5 : vector<1x1x32xf32> to vector<1x32xf32>
    %7 = vector.broadcast %6 : vector<1x32xf32> to vector<64x32xf32>
    %8 = arith.addf %4, %7 : vector<64x32xf32>
    %c0_8 = arith.constant 0 : index
    %c0_9 = arith.constant 0 : index
    %c0_10 = arith.constant 0 : index
    %9 = vector.load %arg5[%c0_8, %c0_9, %c0_10] : memref<1x64x32xf32, #tpu.memory_space<vmem>>, vector<1x64x32xf32>
    %10 = vector.shape_cast %9 : vector<1x64x32xf32> to vector<64x32xf32>
    %11 = vector.shape_cast %8 : vector<64x32xf32> to vector<1x64x32xf32>
    tpu.vector_store %arg5[%c0_8, %c0_9, %c0_10], %11 {strides = array<i32>} : memref<1x64x32xf32, #tpu.memory_space<vmem>>, vector<1x64x32xf32>,
    return
  }
  func.func @transform_0(%arg0: i32, %arg1: i32) -> (i32, i32, i32) {
    %c0_i32 = arith.constant 0 : i32
    %c0_i32_0 = arith.constant 0 : i32
    return %arg0, %arg1, %c0_i32 : i32, i32, i32
  }
  func.func @transform_1(%arg0: i32, %arg1: i32) -> (i32, i32, i32) {
    %c0_i32 = arith.constant 0 : i32
    %c0_i32_0 = arith.constant 0 : i32
    %c0_i32_1 = arith.constant 0 : i32
    return %arg0, %c0_i32, %c0_i32_0 : i32, i32, i32
  }
  func.func @transform_2(%arg0: i32, %arg1: i32) -> (i32, i32, i32) {
    %c0_i32 = arith.constant 0 : i32
    %c0_i32_0 = arith.constant 0 : i32
    %c0_i32_1 = arith.constant 0 : i32
    return %arg0, %c0_i32, %c0_i32_0 : i32, i32, i32
  }
  func.func @transform_3(%arg0: i32, %arg1: i32) -> (i32, i32, i32) {
    %c0_i32 = arith.constant 0 : i32
    %c0_i32_0 = arith.constant 0 : i32
    return %arg0, %arg1, %c0_i32 : i32, i32, i32
  }
}

</mosaic_0001>

<llo_original>
// kernel: tpu_custom_call.1
$region0: #{tpu_custom_call.1}
  #allocation0 [shape = 'u32[]', space=smem, size = 0x4, offset = 0x4, fixed_abs, tag = 'smem constant byte address 0x4 - core index']
  #allocation1 [shape = 'u32[72,128]{1,0:T(1,128)}', space=vmem, size = 0x9000, scoped, tag = 'internal scratch']
  %s0 = inlined_call_operand.vmem [shape: f32[2,64,64], index: 0, kind: input, shape index: {}]
  %s1 = inlined_call_operand.vmem [shape: f32[2,64,32], index: 1, kind: input, shape index: {}]
  %s2 = inlined_call_operand.vmem [shape: f32[2,1,32], index: 2, kind: input, shape index: {}]
  %s3 = inlined_call_operand.vmem [shape: f32[2,64,32], index: 3, kind: output, shape index: {}]
  %s4 = sld [smem:[#allocation0]]
  $region45: #{tpu_custom_call.1} parent=0
    _
  %s6 = ssub.s32 1, %s4
  %s7 = scalar_select 0, %s6, %s4
  loop: start=0, step=1, limit=4
  $region2: #{tpu_custom_call.1} parent=0 // loop_pre_header
    _
  $region3: #{tpu_custom_call.1} parent=0 // loop_header
    %s9 = sphi 0, %s13
    %p10 = scmp.ge.s32.totalorder %s9, 4
    %s16 = sphi 0, %s28
    %s17 = sphi 0, %s24
    %s18 = sphi 0, %s16
    %s19 = sphi 0, %s17
    %s20 = sphi 0, %s18
    %s21 = sphi 0, %s19
    %s33 = sphi 0, %s35
    %s36 = sphi 0, %s33
    %s37 = sphi 0, %s36
    %s53 = sphi 0, %s37
    %s59 = sphi 0, %s61
    %s62 = sphi 0, %s59
    %s63 = sphi 0, %s62
    %s79 = sphi 0, %s63
    %s85 = sphi 0, %s87
    %s88 = sphi 0, %s85
    %s89 = sphi 0, %s88
    %s105 = sphi 0, %s89
    %s113 = sphi 0, %s115
    %s116 = sphi 0, %s113
    %s117 = sphi 0, %s116
    %s133 = sphi 0, %s117
  $region4: #{tpu_custom_call.1} parent=0 // loop_header_branch
    %12 = sbr.rel (%p10) target = $region8
  $region5: #{tpu_custom_call.1} parent=0 // loop_body
    %s14 = ssub.s32 %s9, 1
    %s15 = ssub.s32 %s9, 2
    %s22 = sadd.s32 1, %s17
    %p23 = scmp.ge.s32.totalorder %s22, 1
    %s24 = scalar_select %p23, 0, %s22
    %s25 = sadd.s32 1, %s16
    %s26 = scalar_select %p23, %s25, %s16
    %p27 = scmp.ge.s32.totalorder %s26, 2
    %s28 = scalar_select %p27, 0, %s26
    %s29 = ssub.s32 %s16, %s28
    %s30 = ssub.s32 %s17, %s24
    %s31 = sor.u32 %s29, %s30
    %p32 = scmp.eq.s32.totalorder %s31, 0
    %s34 = sadd.s32 %s33, 1
    %s35 = scalar_select %p32, %s33, %s34
    %p38 = pneg %p32
    %p39 = scmp.eq.s32.totalorder %s9, 1
    %p40 = por %p38, %p39
    %p41 = scmp.ne.s32.totalorder %s33, %s36
    %p42 = scmp.eq.s32.totalorder %s9, 0
    %p43 = por %p41, %p42
    %p44 = scmp.ne.s32.totalorder %s33, %s36
    %p45 = scmp.eq.s32.totalorder %s14, 1
    %p46 = por %p44, %p45
    %p47 = scmp.ne.s32.totalorder %s36, %s37
    %p48 = scmp.eq.s32.totalorder %s14, 0
    %p49 = por %p47, %p48
    %p50 = scmp.ne.s32.totalorder %s36, %s37
    %p51 = scmp.eq.s32.totalorder %s15, 1
    %p52 = por %p50, %p51
    %p54 = scmp.ne.s32.totalorder %s37, %s53
    %p55 = scmp.eq.s32.totalorder %s15, 0
    %p56 = por %p54, %p55
    %s57 = ssub.s32 %s16, %s28
    %p58 = scmp.eq.s32.totalorder %s57, 0
    %s60 = sadd.s32 %s59, 1
    %s61 = scalar_select %p58, %s59, %s60
    %p64 = pneg %p58
    %p65 = scmp.eq.s32.totalorder %s9, 1
    %p66 = por %p64, %p65
    %p67 = scmp.ne.s32.totalorder %s59, %s62
    %p68 = scmp.eq.s32.totalorder %s9, 0
    %p69 = por %p67, %p68
    %p70 = scmp.ne.s32.totalorder %s59, %s62
    %p71 = scmp.eq.s32.totalorder %s14, 1
    %p72 = por %p70, %p71
    %p73 = scmp.ne.s32.totalorder %s62, %s63
    %p74 = scmp.eq.s32.totalorder %s14, 0
    %p75 = por %p73, %p74
    %p76 = scmp.ne.s32.totalorder %s62, %s63
    %p77 = scmp.eq.s32.totalorder %s15, 1
    %p78 = por %p76, %p77
    %p80 = scmp.ne.s32.totalorder %s63, %s79
    %p81 = scmp.eq.s32.totalorder %s15, 0
    %p82 = por %p80, %p81
    %s83 = ssub.s32 %s16, %s28
    %p84 = scmp.eq.s32.totalorder %s83, 0
    %s86 = sadd.s32 %s85, 1
    %s87 = scalar_select %p84, %s85, %s86
    %p90 = pneg %p84
    %p91 = scmp.eq.s32.totalorder %s9, 1
    %p92 = por %p90, %p91
    %p93 = scmp.ne.s32.totalorder %s85, %s88
    %p94 = scmp.eq.s32.totalorder %s9, 0
    %p95 = por %p93, %p94
    %p96 = scmp.ne.s32.totalorder %s85, %s88
    %p97 = scmp.eq.s32.totalorder %s14, 1
    %p98 = por %p96, %p97
    %p99 = scmp.ne.s32.totalorder %s88, %s89
    %p100 = scmp.eq.s32.totalorder %s14, 0
    %p101 = por %p99, %p100
    %p102 = scmp.ne.s32.totalorder %s88, %s89
    %p103 = scmp.eq.s32.totalorder %s15, 1
    %p104 = por %p102, %p103
    %p106 = scmp.ne.s32.totalorder %s89, %s105
    %p107 = scmp.eq.s32.totalorder %s15, 0
    %p108 = por %p106, %p107
    %s109 = ssub.s32 %s16, %s28
    %s110 = ssub.s32 %s17, %s24
    %s111 = sor.u32 %s109, %s110
    %p112 = scmp.eq.s32.totalorder %s111, 0
    %s114 = sadd.s32 %s113, 1
    %s115 = scalar_select %p112, %s113, %s114
    %p118 = pneg %p112
    %p119 = scmp.eq.s32.totalorder %s9, 1
    %p120 = por %p118, %p119
    %p121 = scmp.ne.s32.totalorder %s113, %s116
    %p122 = scmp.eq.s32.totalorder %s9, 0
    %p123 = por %p121, %p122
    %p124 = scmp.ne.s32.totalorder %s113, %s116
    %p125 = scmp.eq.s32.totalorder %s14, 1
    %p126 = por %p124, %p125
    %p127 = scmp.ne.s32.totalorder %s116, %s117
    %p128 = scmp.eq.s32.totalorder %s14, 0
    %p129 = por %p127, %p128
    %p130 = scmp.ne.s32.totalorder %s116, %s117
    %p131 = scmp.eq.s32.totalorder %s15, 1
    %p132 = por %p130, %p131
    %p134 = scmp.ne.s32.totalorder %s117, %s133
    %p135 = scmp.eq.s32.totalorder %s15, 0
    %p136 = por %p134, %p135
    %p137 = scmp.le.s32.totalorder 1, %s9
    %p138 = scmp.lt.s32.totalorder %s9, 3
    %p139 = pnand %p137, %p138
    %p140 = pneg %p139
    // Predicated region
    $region9: #{tpu_custom_call.1} parent=5 // pred_check
      _
    $region10: #{tpu_custom_call.1} parent=5 // pred_check_branch
      %142 = sbr.rel (%p139) target = $region12
    $region11: #{tpu_custom_call.1} parent=5 // pred_region
      %s143 = ssub.s32 %s9, 1
    $region12: #{tpu_custom_call.1} parent=5 // pred_fallthru
      _
    %p144 = scmp.lt.s32.totalorder %s9, 2
    // Predicated region
    $region13: #{tpu_custom_call.1} parent=5 // pred_check
      %p145 = pneg %p144
    $region14: #{tpu_custom_call.1} parent=5 // pred_check_branch
      %147 = sbr.rel (%p145) target = $region16
    $region15: #{tpu_custom_call.1} parent=5 // pred_region
      // Predicated region
      $region17: #{tpu_custom_call.1} parent=15 // pred_check
        %p148 = pneg %p43
      $region18: #{tpu_custom_call.1} parent=15 // pred_check_branch
        %150 = sbr.rel (%p148) target = $region20
      $region19: #{tpu_custom_call.1} parent=15 // pred_region
        %s151 = smul.u32 8, %s17
        %p152 = scmp.lt.s32.totalorder %s16, 1
        %s153 = scalar_select %p152, %s16, 1
        %p154 = scmp.lt.s32.totalorder %s151, 7
        %s155 = scalar_select %p154, %s151, 7
        %s156 = smul.addr %s153, 8
        %s157 = sadd.s32 %s155, %s156
        %s158 = smul.addr %s157, 8
        %s159 = scalar_lea.vmem %s0, %s158
        %s160 = smul.u32 8, %s17
      $region20: #{tpu_custom_call.1} parent=15 // pred_fallthru
        _
      // Predicated region
      $region21: #{tpu_custom_call.1} parent=15 // pred_check
        %p161 = pneg %p69
      $region22: #{tpu_custom_call.1} parent=15 // pred_check_branch
        %163 = sbr.rel (%p161) target = $region24
      $region23: #{tpu_custom_call.1} parent=15 // pred_region
        %p164 = scmp.lt.s32.totalorder %s16, 1
        %s165 = scalar_select %p164, %s16, 1
        %s166 = smul.addr %s165, 8
        %s167 = smul.addr %s166, 8
        %s168 = scalar_lea.vmem %s1, %s167
      $region24: #{tpu_custom_call.1} parent=15 // pred_fallthru
        _
      // Predicated region
      $region25: #{tpu_custom_call.1} parent=15 // pred_check
        %p169 = pneg %p95
      $region26: #{tpu_custom_call.1} parent=15 // pred_check_branch
        %171 = sbr.rel (%p169) target = $region28
      $region27: #{tpu_custom_call.1} parent=15 // pred_region
        %p172 = scmp.lt.s32.totalorder %s16, 1
        %s173 = scalar_select %p172, %s16, 1
        %s174 = scalar_lea.vmem %s2, %s173
      $region28: #{tpu_custom_call.1} parent=15 // pred_fallthru
        _
    $region16: #{tpu_custom_call.1} parent=5 // pred_fallthru
      _
    %p175 = scmp.le.s32.totalorder 1, %s9
    %p176 = scmp.lt.s32.totalorder %s9, 3
    %p177 = pnand %p175, %p176
    %p178 = pneg %p177
    // Predicated region
    $region29: #{tpu_custom_call.1} parent=5 // pred_check
      _
    $region30: #{tpu_custom_call.1} parent=5 // pred_check_branch
      %180 = sbr.rel (%p177) target = $region32
    $region31: #{tpu_custom_call.1} parent=5 // pred_region
      %s181 = ssub.s32 %s9, 1
      %s182 = smul.u32 8, %s19
      %p183 = scmp.lt.s32.totalorder %s18, 1
      %s184 = scalar_select %p183, %s18, 1
      %p185 = scmp.lt.s32.totalorder %s182, 7
      %s186 = scalar_select %p185, %s182, 7
      %s187 = smul.addr %s184, 8
      %s188 = sadd.s32 %s186, %s187
      %s189 = smul.addr %s188, 8
      %s190 = scalar_lea.vmem %s0, %s189
      %p191 = pneg %p49
      %p192 = pneg %p46
      %p193 = scmp.lt.s32.totalorder %s18, 1
      %s194 = scalar_select %p193, %s18, 1
      %s195 = smul.addr %s194, 8
      %s196 = smul.addr %s195, 8
      %s197 = scalar_lea.vmem %s1, %s196
      %p198 = pneg %p75
      %p199 = pneg %p72
      %p200 = scmp.lt.s32.totalorder %s18, 1
      %s201 = scalar_select %p200, %s18, 1
      %s202 = scalar_lea.vmem %s2, %s201
      %p203 = pneg %p101
      %p204 = pneg %p98
      %p205 = pneg %p129
      %p206 = pneg %p126
      %s207 = smul.u32 8, %s19
      %p208 = scmp.lt.s32.totalorder %s18, 1
      %s209 = scalar_select %p208, %s18, 1
      %p210 = scmp.lt.s32.totalorder %s207, 7
      %s211 = scalar_select %p210, %s207, 7
      %s212 = smul.addr %s209, 8
      %s213 = sadd.s32 %s211, %s212
      %s214 = smul.addr %s213, 8
      %s215 = scalar_lea.vmem %s3, %s214
      %s216 = smul.u32 8, %s19
      %p217 = scmp.lt.s32.totalorder %s18, 1
      %s218 = scalar_select %p217, %s18, 1
      %p219 = scmp.lt.s32.totalorder %s216, 7
      %s220 = scalar_select %p219, %s216, 7
      %s221 = smul.addr %s218, 8
      %s222 = sadd.s32 %s220, %s221
      %s223 = smul.addr %s222, 8
      %s224 = scalar_lea.vmem %s0, %s223
      %s225 = smul.u32 8, %s19
      %p226 = scmp.lt.s32.totalorder %s18, 1
      %s227 = scalar_select %p226, %s18, 1
      %s228 = smul.addr %s227, 8
      %s229 = smul.addr %s228, 8
      %s230 = scalar_lea.vmem %s1, %s229
      %p231 = scmp.lt.s32.totalorder %s18, 1
      %s232 = scalar_select %p231, %s18, 1
      %s233 = scalar_lea.vmem %s2, %s232
      %s234 = smul.u32 8, %s19
      %p235 = scmp.lt.s32.totalorder %s18, 1
      %s236 = scalar_select %p235, %s18, 1
      %p237 = scmp.lt.s32.totalorder %s234, 7
      %s238 = scalar_select %p237, %s234, 7
      %s239 = smul.addr %s236, 8
      %s240 = sadd.s32 %s238, %s239
      %s241 = smul.addr %s240, 8
      %s242 = scalar_lea.vmem %s3, %s241
      %s243 = smul.u32 8, %s19
      %v244 = vld [vmem:[%s224] sm:$0xff]
      %v245 = vld [vmem:[%s224 + $0x8] sm:$0xff]
      %v246 = vld [vmem:[%s224 + $0x10] sm:$0xff]
      %v247 = vld [vmem:[%s224 + $0x18] sm:$0xff]
      %v248 = vld [vmem:[%s224 + $0x20] sm:$0xff]
      %v249 = vld [vmem:[%s224 + $0x28] sm:$0xff]
      %v250 = vld [vmem:[%s224 + $0x30] sm:$0xff]
      %v251 = vld [vmem:[%s224 + $0x38] sm:$0xff]
      %v252 = vld [vmem:[%s230] sm:$0xff]
      %v253 = vld [vmem:[%s230 + $0x8] sm:$0xff]
      %v254 = vld [vmem:[%s230 + $0x10] sm:$0xff]
      %v255 = vld [vmem:[%s230 + $0x18] sm:$0xff]
      %v256 = vld [vmem:[%s230 + $0x20] sm:$0xff]
      %v257 = vld [vmem:[%s230 + $0x28] sm:$0xff]
      %v258 = vld [vmem:[%s230 + $0x30] sm:$0xff]
      %v259 = vld [vmem:[%s230 + $0x38] sm:$0xff]
      %v260 = vld [vmem:[%s233] sm:$0x1]
      %v262 = vperm.slane %v260, 0
      %vm264 = vcmask 523264
      %v266 = vsel %vm264, %v244, 0
      %v269 = vsel %vm264, %v245, 0
      %v272 = vsel %vm264, %v246, 0
      %v275 = vsel %vm264, %v247, 0
      %v278 = vsel %vm264, %v248, 0
      %v281 = vsel %vm264, %v249, 0
      %v284 = vsel %vm264, %v250, 0
      %v287 = vsel %vm264, %v251, 0
      %289 = vmatpush.msra.mxu0 0.0
      %290 = vmatpush.msra.mxu0 0.0
      %291 = vmatpush.msra.mxu0 0.0
      %292 = vmatpush.msra.mxu0 0.0
      %293 = vmatpush.msra.mxu0 0.0
      %294 = vmatpush.msra.mxu0 0.0
      %295 = vmatpush.msra.mxu0 0.0
      %296 = vmatpush.msra.mxu0 0.0
      %297 = vmatpush.msra.mxu0 %v259
      %298 = vmatpush.msra.mxu0 %v258
      %299 = vmatpush.msra.mxu0 %v257
      %300 = vmatpush.msra.mxu0 %v256
      %301 = vmatpush.msra.mxu0 %v255
      %302 = vmatpush.msra.mxu0 %v254
      %303 = vmatpush.msra.mxu0 %v253
      %304 = vmatpush.msra.mxu0 %v252
      %305 = vmatmul.f32.gmra.mxu0 %v266
      %v306 = vpop.f32.mrf.mxu0
      %v307 = vadd.f32 %v262, %v306
      %308 = vmatmul.f32.gmra.mxu0 %v269
      %v309 = vpop.f32.mrf.mxu0
      %v310 = vadd.f32 %v262, %v309
      %311 = vmatmul.f32.gmra.mxu0 %v272
      %v312 = vpop.f32.mrf.mxu0
      %v313 = vadd.f32 %v262, %v312
      %314 = vmatmul.f32.gmra.mxu0 %v275
      %v315 = vpop.f32.mrf.mxu0
      %v316 = vadd.f32 %v262, %v315
      %317 = vmatmul.f32.gmra.mxu0 %v278
      %v318 = vpop.f32.mrf.mxu0
      %v319 = vadd.f32 %v262, %v318
      %320 = vmatmul.f32.gmra.mxu0 %v281
      %v321 = vpop.f32.mrf.mxu0
      %v322 = vadd.f32 %v262, %v321
      %323 = vmatmul.f32.gmra.mxu0 %v284
      %v324 = vpop.f32.mrf.mxu0
      %v325 = vadd.f32 %v262, %v324
      %326 = vmatmul.f32.gmra.mxu0 %v287
      %v327 = vpop.f32.mrf.mxu0
      %v328 = vadd.f32 %v262, %v327
      %329 = vdwg.mxu0
      %vm330 = vcmask 261120
      %331 = vst.msk [vmem:[%s242] sm:$0xff] %vm330, %v307
      %332 = vst.msk [vmem:[%s242 + $0x8] sm:$0xff] %vm330, %v310
      %333 = vst.msk [vmem:[%s242 + $0x10] sm:$0xff] %vm330, %v313
      %334 = vst.msk [vmem:[%s242 + $0x18] sm:$0xff] %vm330, %v316
      %335 = vst.msk [vmem:[%s242 + $0x20] sm:$0xff] %vm330, %v319
      %336 = vst.msk [vmem:[%s242 + $0x28] sm:$0xff] %vm330, %v322
      %337 = vst.msk [vmem:[%s242 + $0x30] sm:$0xff] %vm330, %v325
      %338 = vst.msk [vmem:[%s242 + $0x38] sm:$0xff] %vm330, %v328
      %s339 = smul.u32 8, %s19
      %p340 = scmp.lt.s32.totalorder %s18, 1
      %s341 = scalar_select %p340, %s18, 1
      %p342 = scmp.lt.s32.totalorder %s339, 7
      %s343 = scalar_select %p342, %s339, 7
      %s344 = smul.addr %s341, 8
      %s345 = sadd.s32 %s343, %s344
      %s346 = smul.addr %s345, 8
      %s347 = scalar_lea.vmem %s3, %s346
      // Predicated region
      $region33: #{tpu_custom_call.1} parent=31 // pred_check
        %p348 = pneg %p126
      $region34: #{tpu_custom_call.1} parent=31 // pred_check_branch
        %350 = sbr.rel (%p348) target = $region36
      $region35: #{tpu_custom_call.1} parent=31 // pred_region
        %s351 = smul.u32 8, %s19
      $region36: #{tpu_custom_call.1} parent=31 // pred_fallthru
        _
    $region32: #{tpu_custom_call.1} parent=5 // pred_fallthru
      _
    %p352 = scmp.le.s32.totalorder 2, %s9
    // Predicated region
    $region37: #{tpu_custom_call.1} parent=5 // pred_check
      %p353 = pneg %p352
    $region38: #{tpu_custom_call.1} parent=5 // pred_check_branch
      %355 = sbr.rel (%p353) target = $region40
    $region39: #{tpu_custom_call.1} parent=5 // pred_region
      %s356 = ssub.s32 %s9, 2
      // Predicated region
      $region41: #{tpu_custom_call.1} parent=39 // pred_check
        %p357 = pneg %p132
      $region42: #{tpu_custom_call.1} parent=39 // pred_check_branch
        %359 = sbr.rel (%p357) target = $region44
      $region43: #{tpu_custom_call.1} parent=39 // pred_region
        %s360 = smul.u32 8, %s21
        %p361 = scmp.lt.s32.totalorder %s20, 1
        %s362 = scalar_select %p361, %s20, 1
        %p363 = scmp.lt.s32.totalorder %s360, 7
        %s364 = scalar_select %p363, %s360, 7
        %s365 = smul.addr %s362, 8
        %s366 = sadd.s32 %s364, %s365
        %s367 = smul.addr %s366, 8
        %s368 = scalar_lea.vmem %s3, %s367
      $region44: #{tpu_custom_call.1} parent=39 // pred_fallthru
        _
    $region40: #{tpu_custom_call.1} parent=5 // pred_fallthru
      _
  $region6: #{tpu_custom_call.1} parent=0 // loop_footer
    %s13 = sadd.s32 1, %s9
  $region7: #{tpu_custom_call.1} parent=0 // loop_footer_branch
    %8 = sbr.rel target = $region3
  $region8: #{tpu_custom_call.1} parent=0 // loop_exit
    _

</llo_original>
